<compile_context>
chip_gen: v7x
topology: tpu7x:2x2x1
jax: 0.10.0
libtpu: 0.0.40
codegen_flags: <defaults>
</compile_context>

<pallas_src>
import jax
import jax.numpy as jnp
from jax import lax
from jax.experimental import pallas as pl
from jax.experimental.pallas import tpu as pltpu


def _round_up(a: int, m: int) -> int:
    return ((a + m - 1) // m) * m


def _pack(dtype) -> int:
    """Native sublane packing (rows per 32-bit sublane group) for a dtype."""
    it = jnp.dtype(dtype).itemsize
    return max(8, 32 // max(1, it))      # f32 -> 8, bf16 -> 16, int8/fp8 -> 32


def _vmem_limit_bytes() -> int:
    """Per-generation scoped-VMEM limit (conservative if the query fails)."""
    phys = None
    try:
        phys = getattr(pltpu.get_tpu_info(), "vmem_capacity_bytes", None)
    except Exception:
        phys = None
    if phys is None or phys <= 64 * 1024 * 1024:     # unknown or v7x-class (64 MiB)
        return 48 * 1024 * 1024
    return 96 * 1024 * 1024                          # v5e / v6e (128 MiB physical)


def _num_tensorcores() -> int:
    """Best-effort TensorCore count of one device (1 if unknown)."""
    try:
        info = pltpu.get_tpu_info()
        for attr in ("num_cores", "core_count", "num_tensorcores"):
            n = getattr(info, attr, None)
            if isinstance(n, int) and n > 0:
                return n
    except Exception:
        pass
    try:
        dev = jax.devices()[0]
        for attr in ("num_cores", "core_count"):
            n = getattr(dev, attr, None)
            if isinstance(n, int) and n > 0:
                return n
    except Exception:
        pass
    return 1


def _make_kernel(inv_hw: float, dot_dtype):
    def kernel(x_ref, w_ref, b_ref, o_ref, acc_ref):
        k = pl.program_id(1)

        @pl.when(k == 0)
        def _init():
            acc_ref[...] = jnp.zeros_like(acc_ref)

        # Global average pool over the lane (H*W) axis, f32 accumulation
        # straight from the input dtype (no full-precision block temporary).
        pooled = jnp.sum(x_ref[...], axis=-1, dtype=jnp.float32) * inv_hw  # (bb, cb)

        # Fused linear: contract pooled channels against dim 1 of the
        # (out_features, C)-layout weight kept in its native dtype; accumulate
        # in f32 on the MXU.  (When the weight is low precision, pooled is cast
        # down to it, matching the module's behaviour under autocast.)
        wv = w_ref[...]
        if wv.dtype != dot_dtype:
            wv = wv.astype(dot_dtype)
        acc_ref[...] += lax.dot_general(
            pooled.astype(dot_dtype), wv,
            dimension_numbers=(((1,), (1,)), ((), ())),
            preferred_element_type=jnp.float32)

        @pl.when(k == pl.num_programs(1) - 1)
        def _finalize():
            o_ref[...] = (acc_ref[...] + b_ref[...]).astype(o_ref.dtype)

    return kernel


def pooling_linear(x: jax.Array,
                   weight: jax.Array,
                   bias: jax.Array | None = None,
                   *,
                   target_x_block_bytes: int = 16 * 1024 * 1024) -> jax.Array:
    """PoolingLinear forward: global avg pool (flatten) + Linear.

    x:      (B, C, H, W)        any float dtype
    weight: (out_features, C)   torch nn.Linear layout, native dtype
    bias:   (out_features,) or None
    returns (B, out_features) in x.dtype (f32 accumulation inside)
    """
    B, C, H, W = x.shape
    NF, C_w = weight.shape
    assert C_w == C, (C_w, C)
    hw = H * W
    inv_hw = 1.0 / float(hw)

    out_dtype = x.dtype
    x_it = jnp.dtype(x.dtype).itemsize
    w_it = jnp.dtype(weight.dtype).itemsize
    o_it = jnp.dtype(out_dtype).itemsize
    dot_dtype = jnp.dtype(weight.dtype) if weight.dtype == x.dtype else jnp.dtype(jnp.float32)

    bias2 = (jnp.zeros((1, NF), jnp.float32) if bias is None
             else bias.astype(jnp.float32).reshape(1, NF))

    # Lane-major view of the spatial axis; pure view, no HBM copy, no padding.
    x3 = x.reshape(B, C, hw)

    # ---------------- VMEM accounting (padded layout, double buffered) ------
    limit = _vmem_limit_bytes()
    budget = (limit * 3) // 4                         # headroom for Mosaic scratch
    hw_p = _round_up(hw, 128)
    nf_lane = _round_up(NF, 128)
    bb_align = max(8, 32 // max(1, o_it))             # sublane pack of the output
    bias_bytes = 2 * 8 * nf_lane * 4

    def x_row_bytes(cb):                              # one batch row of one x buffer
        return _round_up(cb, _pack(x.dtype)) * hw_p * x_it

    def w_block_bytes(cb):                            # (NF, cb) block, double buffered
        return 2 * _round_up(NF, _pack(weight.dtype)) * _round_up(cb, 128) * w_it

    def per_row_bytes(cb):                            # 2x x buffers + acc + 2x out
        return 2 * x_row_bytes(cb) + nf_lane * (4 + 2 * o_it)

    def max_rows(cb):
        fixed = w_block_bytes(cb) + bias_bytes + bb_align * nf_lane * (4 + 2 * o_it)
        return (budget - fixed) // per_row_bytes(cb)

    def feasible(cb):
        return max_rows(cb) >= min(B, bb_align)

    # Channel tile: prefer the full channel extent (weight stays resident in
    # VMEM -> loaded from HBM once).  Fall back to a multiple-of-128 divisor of
    # C (exact, never padded) only when C*HW or NF*C is too large for VMEM.
    if feasible(C):
        cb = C
    else:
        cb = None
        divs = [d for d in range(128, C, 128) if C % d == 0]
        for d in sorted(divs, reverse=True):
            if feasible(d):
                cb = d
                break
        if cb is None:
            cb = divs[0] if divs else C               # best effort; still exact
    nc = C // cb

    # Batch tile: as large as the VMEM budget and the ~16 MiB x-block target
    # allow; multiple of the output sublane pack (or the full batch extent).
    bb = min(B, max_rows(cb), max(1, target_x_block_bytes // x_row_bytes(cb)))
    bb = max(1, bb)
    if bb >= B:
        bb = B
    else:
        bb = max(bb_align, (bb // bb_align) * bb_align)
    # Give the "parallel" batch axis >=2 blocks only on multi-TensorCore chips.
    if _num_tensorcores() >= 2 and bb >= B and B >= 2 * bb_align:
        bb = _round_up((B + 1) // 2, bb_align)
    nb = pl.cdiv(B, bb)

    grid = (nb, nc)

    out = pl.pallas_call(
        _make_kernel(inv_hw, dot_dtype),
        out_shape=jax.ShapeDtypeStruct((B, NF), out_dtype),
        grid=grid,
        in_specs=[
            # x: (bb, cb, hw); H*W on the lane axis (full extent).
            pl.BlockSpec((bb, cb, hw), lambda i, k: (i, k, 0)),
            # weight: native (NF, C) layout; constant block index when cb == C
            # -> resident in VMEM, fetched from HBM exactly once.
            pl.BlockSpec((NF, cb), lambda i, k: (0, k)),
            # bias: resident.
            pl.BlockSpec((1, NF), lambda i, k: (0, 0)),
        ],
        out_specs=pl.BlockSpec((bb, NF), lambda i, k: (i, 0)),
        scratch_shapes=[pltpu.VMEM((bb, NF), jnp.float32)],
        compiler_params=pltpu.CompilerParams(
            dimension_semantics=("parallel", "arbitrary"),
            vmem_limit_bytes=limit,
        ),
        cost_estimate=pl.CostEstimate(
            flops=2 * B * C * NF + B * C * hw,
            transcendentals=0,
            bytes_accessed=B * C * hw * x_it + NF * C * w_it + B * NF * o_it + NF * 4,
        ),
    )(x3, weight, bias2)

    return out


def _reference(x, weight, bias):
    pooled = jnp.mean(x.astype(jnp.float32), axis=(2, 3))
    out = pooled @ weight.astype(jnp.float32).T
    if bias is not None:
        out = out + bias.astype(jnp.float32)
    return out


if __name__ == "__main__":
    key = jax.random.PRNGKey(0)
    kx, kw = jax.random.split(key)

    B, C, H, W = 2, 4, 16, 16
    NF = 8  # out_features

    x = jax.random.normal(kx, (B, C, H, W), dtype=jnp.float32)
    # nn.init.normal_(weight, 0, 0.01); nn.init.constant_(bias, 0)
    weight = 0.01 * jax.random.normal(kw, (NF, C), dtype=jnp.float32)
    bias = jnp.zeros((NF,), dtype=jnp.float32)

    out = jax.block_until_ready(pooling_linear(x, weight, bias))

    ref = _reference(x, weight, bias)
    assert out.shape == (B, NF), out.shape
    assert out.dtype == x.dtype, out.dtype
    assert jnp.allclose(out, ref.astype(out.dtype), atol=1e-5, rtol=1e-5), \
        "mismatch vs reference"
    print("KERNEL_OK")
</pallas_src>

<mosaic_0001>
module attributes {stable_mosaic.version = 11 : i64} {
  func.func @kernel(%arg0: i32, %arg1: i32, %arg2: memref<2x4x256xf32, #tpu.memory_space<vmem>>, %arg3: memref<8x4xf32, #tpu.memory_space<vmem>>, %arg4: memref<1x8xf32, #tpu.memory_space<vmem>>, %arg5: memref<2x8xf32, #tpu.memory_space<vmem>>, %arg6: memref<2x8xf32, #tpu.memory_space<vmem>>) attributes {dimension_semantics = [#tpu.dimension_semantics<parallel>, #tpu.dimension_semantics<arbitrary>], iteration_bounds = array<i64: 1, 1>, scalar_prefetch = 0 : i64, scratch_operands = 1 : i64, tpu.core_type = #tpu.core_type<tc>, window_params = [{transform_indices = @transform_0, window_bounds = array<i64: 2, 4, 256>}, {transform_indices = @transform_1, window_bounds = array<i64: 8, 4>}, {pipeline_mode = #tpu.pipeline_mode<synchronous>, transform_indices = @transform_2, window_bounds = array<i64: 1, 8>}, {transform_indices = @transform_3, window_bounds = array<i64: 2, 8>}]} {
    %c0_i32 = arith.constant 0 : i32
    %0 = arith.cmpi eq, %arg1, %c0_i32 : i32
    %1 = arith.extui %0 : i1 to i32
    %c0_i32_0 = arith.constant 0 : i32
    %2 = arith.cmpi ne, %1, %c0_i32_0 : i32
    scf.if %2 {
      %cst_13 = arith.constant 0.000000e+00 : f32
      %15 = vector.broadcast %cst_13 : f32 to vector<2x8xf32>
      %c0_14 = arith.constant 0 : index
      %c0_15 = arith.constant 0 : index
      %16 = vector.load %arg6[%c0_14, %c0_15] : memref<2x8xf32, #tpu.memory_space<vmem>>, vector<2x8xf32>
      tpu.vector_store %arg6[%c0_14, %c0_15], %15 {strides = array<i32>} : memref<2x8xf32, #tpu.memory_space<vmem>>, vector<2x8xf32>,
    } else {
    }
    %c0 = arith.constant 0 : index
    %c0_1 = arith.constant 0 : index
    %c0_2 = arith.constant 0 : index
    %3 = vector.load %arg2[%c0, %c0_1, %c0_2] : memref<2x4x256xf32, #tpu.memory_space<vmem>>, vector<2x4x256xf32>
    %cst = arith.constant dense<0.000000e+00> : vector<2x4xf32>
    %4 = vector.multi_reduction <add>, %3, %cst [2] : vector<2x4x256xf32> to vector<2x4xf32>
    %cst_3 = arith.constant 3.906250e-03 : f32
    %5 = vector.broadcast %cst_3 : f32 to vector<2x4xf32>
    %6 = arith.mulf %4, %5 : vector<2x4xf32>
    %c0_4 = arith.constant 0 : index
    %c0_5 = arith.constant 0 : index
    %7 = vector.load %arg3[%c0_4, %c0_5] : memref<8x4xf32, #tpu.memory_space<vmem>>, vector<8x4xf32>
    %c0_6 = arith.constant 0 : index
    %c0_7 = arith.constant 0 : index
    %8 = vector.load %arg6[%c0_6, %c0_7] : memref<2x8xf32, #tpu.memory_space<vmem>>, vector<2x8xf32>
    %cst_8 = arith.constant dense<0.000000e+00> : vector<2x8xf32>
    %9 = tpu.matmul %6, %7, %cst_8 {dimension_numbers = #tpu.dot_dimension_numbers<[1], [1], [0], [0], [0, 0, 1, 0], [], []>} : vector<2x4xf32>, vector<8x4xf32>, vector<2x8xf32> -> vector<2x8xf32>
    %10 = arith.addf %8, %9 : vector<2x8xf32>
    %c0_9 = arith.constant 0 : index
    %c0_10 = arith.constant 0 : index
    %11 = vector.load %arg6[%c0_9, %c0_10] : memref<2x8xf32, #tpu.memory_space<vmem>>, vector<2x8xf32>
    tpu.vector_store %arg6[%c0_9, %c0_10], %10 {strides = array<i32>} : memref<2x8xf32, #tpu.memory_space<vmem>>, vector<2x8xf32>,
    %c0_i32_11 = arith.constant 0 : i32
    %12 = arith.cmpi eq, %arg1, %c0_i32_11 : i32
    %13 = arith.extui %12 : i1 to i32
    %c0_i32_12 = arith.constant 0 : i32
    %14 = arith.cmpi ne, %13, %c0_i32_12 : i32
    scf.if %14 {
      %c0_13 = arith.constant 0 : index
      %c0_14 = arith.constant 0 : index
      %15 = vector.load %arg6[%c0_13, %c0_14] : memref<2x8xf32, #tpu.memory_space<vmem>>, vector<2x8xf32>
      %c0_15 = arith.constant 0 : index
      %c0_16 = arith.constant 0 : index
      %16 = vector.load %arg4[%c0_15, %c0_16] : memref<1x8xf32, #tpu.memory_space<vmem>>, vector<1x8xf32>
      %17 = vector.broadcast %16 : vector<1x8xf32> to vector<2x8xf32>
      %18 = arith.addf %15, %17 : vector<2x8xf32>
      %c0_17 = arith.constant 0 : index
      %c0_18 = arith.constant 0 : index
      %19 = vector.load %arg5[%c0_17, %c0_18] : memref<2x8xf32, #tpu.memory_space<vmem>>, vector<2x8xf32>
      tpu.vector_store %arg5[%c0_17, %c0_18], %18 {strides = array<i32>} : memref<2x8xf32, #tpu.memory_space<vmem>>, vector<2x8xf32>,
    } else {
    }
    return
  }
  func.func @transform_0(%arg0: i32, %arg1: i32) -> (i32, i32, i32) {
    %c0_i32 = arith.constant 0 : i32
    %c0_i32_0 = arith.constant 0 : i32
    return %arg0, %arg1, %c0_i32 : i32, i32, i32
  }
  func.func @transform_1(%arg0: i32, %arg1: i32) -> (i32, i32) {
    %c0_i32 = arith.constant 0 : i32
    %c0_i32_0 = arith.constant 0 : i32
    return %c0_i32, %arg1 : i32, i32
  }
  func.func @transform_2(%arg0: i32, %arg1: i32) -> (i32, i32) {
    %c0_i32 = arith.constant 0 : i32
    %c0_i32_0 = arith.constant 0 : i32
    %c0_i32_1 = arith.constant 0 : i32
    return %c0_i32, %c0_i32_0 : i32, i32
  }
  func.func @transform_3(%arg0: i32, %arg1: i32) -> (i32, i32) {
    %c0_i32 = arith.constant 0 : i32
    %c0_i32_0 = arith.constant 0 : i32
    return %arg0, %c0_i32 : i32, i32
  }
}

</mosaic_0001>

<llo_original>
// kernel: tpu_custom_call.1
$region0: #{tpu_custom_call.1}
  #allocation0 [shape = 'u32[]', space=smem, size = 0x4, offset = 0x4, fixed_abs, tag = 'smem constant byte address 0x4 - core index']
  #allocation1 [shape = 'u32[144,128]{1,0:T(1,128)}', space=vmem, size = 0x12000, scoped, tag = 'internal scratch']
  #allocation2 [shape = 'f32[2,8]{1,0:T(2,128)}', space=vmem, size = 0x400, scoped, tag = 'scratch operand']
  %s0 = inlined_call_operand.hbm [shape: f32[2,4,256], index: 0, kind: input, shape index: {}]
  %s1 = inlined_call_operand.vmem [shape: f32[8,4], index: 1, kind: input, shape index: {}]
  %s2 = inlined_call_operand.vmem [shape: f32[1,8], index: 2, kind: input, shape index: {}]
  %s3 = inlined_call_operand.hbm [shape: f32[2,8], index: 3, kind: output, shape index: {}]
  %s4 = sld [smem:[#allocation0]]
  $region34: #{tpu_custom_call.1} parent=0
    _
  %s6 = ssub.s32 1, %s4
  %s7 = scalar_select 0, %s6, %s4
  $region1: #{tpu_custom_call.1} parent=0
    #allocation3 [shape = 'u8[8192]{0}', space=vmem, size = 0x2000, scoped, tag = 'input window, operand 0, single buffered']
    #allocation4 [shape = 's32[1]{0}', space=sflag, size = 0x4, scoped, tag = 'scoped memory for tpu_custom_call.1']
    #allocation5 [shape = 's32[1]{0}', space=sflag, size = 0x4, scoped, tag = 'scoped memory for tpu_custom_call.1']
    #allocation6 [shape = 'u8[1024]{0}', space=vmem, size = 0x400, scoped, tag = 'output window, operand 0, single buffered']
    %8 = vsyncpa [#allocation4], 0
    %9 = vsyncpa [#allocation5], 0
    // Predicated region
    $region2: #{tpu_custom_call.1} parent=1 // pred_check
      _
    $region3: #{tpu_custom_call.1} parent=1 // pred_check_branch
      %11 = sbr.rel (0) target = $region5
    $region4: #{tpu_custom_call.1} parent=1 // pred_region
      %s13 = ssub.s32 256, 256
      %14 = vsyncadd [#allocation4], %s13
      %s15 = sshll.u32 [#allocation3], 4
      %s16 = int_to_ptr.vmem [resolvable:$true] %s15
      %21 = dma.hbm_to_vmem [thread:$0]  %s0, 256, %s16, [#allocation4], 128, 128, 8
    $region5: #{tpu_custom_call.1} parent=1 // pred_fallthru
      _
    // Predicated region
    $region6: #{tpu_custom_call.1} parent=1 // pred_check
      _
    $region7: #{tpu_custom_call.1} parent=1 // pred_check_branch
      %23 = sbr.rel (0) target = $region9
    $region8: #{tpu_custom_call.1} parent=1 // pred_region
      _
    $region9: #{tpu_custom_call.1} parent=1 // pred_fallthru
      _
    // Predicated region
    $region10: #{tpu_custom_call.1} parent=1 // pred_check
      _
    $region11: #{tpu_custom_call.1} parent=1 // pred_check_branch
      %25 = sbr.rel (0) target = $region13
    $region12: #{tpu_custom_call.1} parent=1 // pred_region
      _
    $region13: #{tpu_custom_call.1} parent=1 // pred_fallthru
      _
    // Predicated region
    $region14: #{tpu_custom_call.1} parent=1 // pred_check
      _
    $region15: #{tpu_custom_call.1} parent=1 // pred_check_branch
      %27 = sbr.rel (0) target = $region17
    $region16: #{tpu_custom_call.1} parent=1 // pred_region
      %28 = dma.done [#allocation4], 256
    $region17: #{tpu_custom_call.1} parent=1 // pred_fallthru
      _
    %p29 = scmp.eq.s32.totalorder 0, 0
    // Predicated region
    $region18: #{tpu_custom_call.1} parent=1 // pred_check
      %p30 = pneg %p29
    $region19: #{tpu_custom_call.1} parent=1 // pred_check_branch
      %32 = sbr.rel (%p30) target = $region21
    $region20: #{tpu_custom_call.1} parent=1 // pred_region
      %vm33 = vcmask 58368
      %34 = vst.msk [vmem:[#allocation2] sm:$0x3] %vm33, 0.0
    $region21: #{tpu_custom_call.1} parent=1 // pred_fallthru
      _
    %v35 = vld [vmem:[#allocation3] sm:$0xff]
    %v36 = vld [vmem:[#allocation3 + $0x8] sm:$0xff]
    %v39 = vcombine.high %v35, %v35
    %v40 = vcombine.high %v36, %v36
    %vm43 = vcmask 1043456
    %v44 = vsel %vm43, %v35, 0.0
    %v45 = vsel %vm43, %v39, 0.0
    %v46 = vadd.f32 %v44, %v45
    %47 = vadd.xlane.f32.xlu0 %v46
    %v48 = vpop.xlane.xlu0 %47
    %v49 = vsel %vm43, %v36, 0.0
    %v50 = vsel %vm43, %v40, 0.0
    %v51 = vadd.f32 %v49, %v50
    %52 = vadd.xlane.f32.xlu0 %v51
    %v53 = vpop.xlane.xlu0 %52
    %v54 = vmul.f32 %v48, 0.00390625
    %v55 = vmul.f32 %v53, 0.00390625
    %v56 = vld [vmem:[%s1] sm:$0xff]
    %v57 = vld [vmem:[#allocation2] sm:$0x3]
    %v60 = vlaneseq
    %v61 = vand.u32 %v60, 127
    %v62 = vlaneseq
    %v63 = vshrl.u32 %v62, 7
    %v64 = vsub.s32 %v61, %v63
    %v65 = vrot.slane %v54, %v64
    %v66 = vlaneseq
    %v67 = vshrl.u32 %v66, 7
    %v68 = vsub.s32 %v61, %v67
    %v69 = vrot.slane %v55, %v68
    %vm70 = vcmask 1041409
    %v71 = vsel %vm70, %v69, %v65
    %vm72 = vcmask 31744
    %v73 = vsel %vm72, %v71, 0
    %v76 = vsel %vm72, %v56, 0
    %78 = vmatprep.subr.mxu0 0.0
    %79 = vmatpush1.xpose.msra.mxu0 %v76
    %80 = vmatprep.subr.mxu0 0.0
    %81 = vmatpush1.xpose.msra.mxu0 0.0
    %82 = vmatprep.subr.mxu0 0.0
    %83 = vmatpush1.xpose.msra.mxu0 0.0
    %84 = vmatprep.subr.mxu0 0.0
    %85 = vmatpush1.xpose.msra.mxu0 0.0
    %86 = vmatprep.subr.mxu0 0.0
    %87 = vmatpush1.xpose.msra.mxu0 0.0
    %88 = vmatprep.subr.mxu0 0.0
    %89 = vmatpush1.xpose.msra.mxu0 0.0
    %90 = vmatprep.subr.mxu0 0.0
    %91 = vmatpush1.xpose.msra.mxu0 0.0
    %92 = vmatprep.subr.mxu0 0.0
    %93 = vmatpush1.xpose.msra.mxu0 0.0
    %94 = vmatprep.subr.mxu0 0.0
    %95 = vmatpush1.xpose.msra.mxu0 0.0
    %96 = vmatprep.subr.mxu0 0.0
    %97 = vmatpush1.xpose.msra.mxu0 0.0
    %98 = vmatprep.subr.mxu0 0.0
    %99 = vmatpush1.xpose.msra.mxu0 0.0
    %100 = vmatprep.subr.mxu0 0.0
    %101 = vmatpush1.xpose.msra.mxu0 0.0
    %102 = vmatprep.subr.mxu0 0.0
    %103 = vmatpush1.xpose.msra.mxu0 0.0
    %104 = vmatprep.subr.mxu0 0.0
    %105 = vmatpush1.xpose.msra.mxu0 0.0
    %106 = vmatprep.subr.mxu0 0.0
    %107 = vmatpush1.xpose.msra.mxu0 0.0
    %108 = vmatprep.subr.mxu0 0.0
    %109 = vmatpush1.xpose.msra.mxu0 0.0
    %110 = vmatprep.subr.mxu0 0.0
    %111 = vmatpush1.xpose.msra.mxu0 0.0
    %112 = vmatprep.subr.mxu0 0.0
    %113 = vmatpush1.xpose.msra.mxu0 0.0
    %114 = vmatprep.subr.mxu0 0.0
    %115 = vmatpush1.xpose.msra.mxu0 0.0
    %116 = vmatprep.subr.mxu0 0.0
    %117 = vmatpush1.xpose.msra.mxu0 0.0
    %118 = vmatprep.subr.mxu0 0.0
    %119 = vmatpush1.xpose.msra.mxu0 0.0
    %120 = vmatprep.subr.mxu0 0.0
    %121 = vmatpush1.xpose.msra.mxu0 0.0
    %122 = vmatprep.subr.mxu0 0.0
    %123 = vmatpush1.xpose.msra.mxu0 0.0
    %124 = vmatprep.subr.mxu0 0.0
    %125 = vmatpush1.xpose.msra.mxu0 0.0
    %126 = vmatprep.subr.mxu0 0.0
    %127 = vmatpush1.xpose.msra.mxu0 0.0
    %128 = vmatprep.subr.mxu0 0.0
    %129 = vmatpush1.xpose.msra.mxu0 0.0
    %130 = vmatprep.subr.mxu0 0.0
    %131 = vmatpush1.xpose.msra.mxu0 0.0
    %132 = vmatprep.subr.mxu0 0.0
    %133 = vmatpush1.xpose.msra.mxu0 0.0
    %134 = vmatprep.subr.mxu0 0.0
    %135 = vmatpush1.xpose.msra.mxu0 0.0
    %136 = vmatprep.subr.mxu0 0.0
    %137 = vmatpush1.xpose.msra.mxu0 0.0
    %138 = vmatprep.subr.mxu0 0.0
    %139 = vmatpush1.xpose.msra.mxu0 0.0
    %140 = vmatprep.subr.mxu0 0.0
    %141 = vmatpush1.xpose.msra.mxu0 0.0
    %142 = vmatprep.mubr.f32.mxu0 0.0
    %143 = vmatmul.mubr.f32.gmra.mrb[0].mxu0 %v73
    %v144 = vpop.f32.mrb[0].mxu0
    %v145 = vadd.f32 0.0, %v144
    %v146 = vpop.f32.mrb[0].mxu0
    %147 = vdwg.mxu0
    %v148 = vadd.f32 %v57, %v145
    %vm149 = vcmask 58368
    %150 = vst.msk [vmem:[#allocation2] sm:$0x3] %vm149, %v148
    // Predicated region
    $region22: #{tpu_custom_call.1} parent=1 // pred_check
      %p151 = pneg %p29
    $region23: #{tpu_custom_call.1} parent=1 // pred_check_branch
      %153 = sbr.rel (%p151) target = $region25
    $region24: #{tpu_custom_call.1} parent=1 // pred_region
      %v154 = vld [vmem:[#allocation2] sm:$0x3]
      %v155 = vld [vmem:[%s2] sm:$0x1]
      %v157 = vlaneseq
      %v158 = vshrl.u32 %v157, 7
      %v159 = vsub.s32 0, %v158
      %v160 = vrot.slane %v155, %v159
      %v162 = vadd.f32 %v154, %v160
      %163 = vst.msk [vmem:[#allocation6] sm:$0x3] %vm149, %v162
    $region25: #{tpu_custom_call.1} parent=1 // pred_fallthru
      _
    // Predicated region
    $region26: #{tpu_custom_call.1} parent=1 // pred_check
      _
    $region27: #{tpu_custom_call.1} parent=1 // pred_check_branch
      %165 = sbr.rel (0) target = $region29
    $region28: #{tpu_custom_call.1} parent=1 // pred_region
      %s167 = ssub.s32 32, 32
      %168 = vsyncadd [#allocation5], %s167
      %s170 = sshll.u32 [#allocation6], 4
      %s171 = int_to_ptr.vmem [resolvable:$true] %s170
      %173 = dma.vmem_to_hbm [thread:$0]  %s171, 32, %s3, [#allocation5]
    $region29: #{tpu_custom_call.1} parent=1 // pred_fallthru
      _
    // Predicated region
    $region30: #{tpu_custom_call.1} parent=1 // pred_check
      _
    $region31: #{tpu_custom_call.1} parent=1 // pred_check_branch
      %175 = sbr.rel (0) target = $region33
    $region32: #{tpu_custom_call.1} parent=1 // pred_region
      %176 = dma.done [#allocation5], 32
    $region33: #{tpu_custom_call.1} parent=1 // pred_fallthru
      _
    %177 = vsyncpa [#allocation4], 1
    %178 = vsyncpa [#allocation5], 1

</llo_original>
